<compile_context>
chip_gen: v7x
topology: tpu7x:2x2x1
jax: 0.10.0
libtpu: 0.0.40
codegen_flags: <defaults>
</compile_context>

<pallas_src>
import jax
import jax.numpy as jnp
from jax.experimental import pallas as pl
from jax.experimental.pallas import tpu as pltpu


def unify_size_kernel(x_ref, w_ref, o_ref):
    # x_ref: (tile_n, K)  VMEM tile of node features
    # w_ref: (K, OUT)     full weight, resident across the grid (constant index_map)
    # o_ref: (tile_n, OUT) output tile
    o_ref[...] = jnp.dot(
        x_ref[...], w_ref[...], preferred_element_type=jnp.float32
    ).astype(o_ref.dtype)


def _round_up(x, m):
    return pl.cdiv(x, m) * m


def _detect_num_tensorcores():
    """Best-effort TensorCore count (v7x megacore has 2); falls back to 1."""
    try:
        info = pltpu.get_tpu_info()
    except Exception:
        return 1
    for attr in ("num_cores", "core_count", "num_tensorcores", "tensorcores_per_chip"):
        v = getattr(info, attr, None)
        if isinstance(v, int) and v > 0:
            return v
    return 1


def _pick_tile_n(n, num_cores, granule):
    """Row-tile heuristic.

    1 TC (v5e/v6e): one tile up to 2048 rows (per-step overhead ~0.35us, so
    fewer/larger steps win; VMEM is nowhere near the limit at these K/OUT).
    2 TCs (v7x): an even number of grid steps, each <= 2048 rows, so both
    cores get balanced work.
    """
    cap = 2048
    n_g = _round_up(max(n, 1), granule)
    if n_g <= granule:
        return n_g
    if num_cores <= 1:
        return min(n_g, cap)
    steps = max(2, 2 * pl.cdiv(n_g, 2 * cap))
    return _round_up(pl.cdiv(n_g, steps), granule)


def unify_size(feats, weight_t, *, tile_n=None, compute_dtype=None,
               out_dtype=None, num_tensorcores=None):
    """Apply the UnifySize linear map to a (N, input_dim) feature matrix.

    feats:         (N, input_dim)
    weight_t:      (input_dim, output_dim)  (PyTorch weight transposed)
    compute_dtype: optional matmul-input dtype (e.g. bf16). Only use this when
                   feats already arrive in that dtype (or the cast fuses with
                   the producer) — for a bandwidth-bound op a wrapper cast adds
                   HBM traffic. Accumulation stays f32.
    out_dtype:     output dtype; defaults to the incoming feats dtype.
    """
    N, K = feats.shape
    Kw, OUT = weight_t.shape
    assert Kw == K, "weight_t must have shape (input_dim, output_dim)"
    if out_dtype is None:
        out_dtype = feats.dtype

    if compute_dtype is not None:
        feats = feats.astype(compute_dtype)
        weight_t = weight_t.astype(compute_dtype)

    # bf16 packs 2 rows/sublane -> prefer 16-row granules; f32 -> 8.
    granule = 16 if jnp.dtype(feats.dtype).itemsize == 2 else 8

    if num_tensorcores is None:
        num_tensorcores = _detect_num_tensorcores()

    if tile_n is None:
        tile_n = _pick_tile_n(N, num_tensorcores, granule)
    else:
        tile_n = max(granule,
                     (min(tile_n, _round_up(N, granule)) // granule) * granule)

    grid = (pl.cdiv(N, tile_n),)

    itemsize_in = jnp.dtype(feats.dtype).itemsize
    itemsize_out = jnp.dtype(out_dtype).itemsize
    cost = pl.CostEstimate(
        flops=2 * N * K * OUT,
        transcendentals=0,
        bytes_accessed=(N * K + K * OUT) * itemsize_in + N * OUT * itemsize_out,
    )

    return pl.pallas_call(
        unify_size_kernel,
        out_shape=jax.ShapeDtypeStruct((N, OUT), out_dtype),
        grid_spec=pltpu.PrefetchScalarGridSpec(
            num_scalar_prefetch=0,
            grid=grid,
            in_specs=[
                # Full-dim K / OUT blocks: legal and avoids padded HBM bytes.
                pl.BlockSpec((tile_n, K), lambda i: (i, 0)),
                pl.BlockSpec((K, OUT), lambda i: (0, 0)),
            ],
            out_specs=pl.BlockSpec((tile_n, OUT), lambda i: (i, 0)),
        ),
        compiler_params=pltpu.CompilerParams(
            dimension_semantics=("parallel",),
        ),
        cost_estimate=cost,
    )(feats, weight_t)


def unify_size_dict(feats_dict, weight_t, **kwargs):
    """Mirror of UnifySize.forward for a dict of per-node-type features.

    All entries share the same linear map and rows are independent, so no
    per-entry padding is needed: one concatenate, one pallas_call, and slices
    back at the natural row offsets.
    """
    keys = list(feats_dict.keys())
    if not keys:
        return {}
    if len(keys) == 1:
        k = keys[0]
        return {k: unify_size(feats_dict[k], weight_t, **kwargs)}

    stacked = jnp.concatenate([feats_dict[k] for k in keys], axis=0)
    out = unify_size(stacked, weight_t, **kwargs)

    result, off = {}, 0
    for k in keys:
        n = feats_dict[k].shape[0]
        result[k] = out[off:off + n]
        off += n
    return result


if __name__ == "__main__":
    key = jax.random.PRNGKey(0)
    k_x1, k_x2, k_w = jax.random.split(key, 3)

    input_dim = 32   # per-node input feature size
    output_dim = 64  # unified output feature size
    n_atom = 16
    n_bond = 8

    # Deterministic "parameter init" for nn.Linear(input_dim, output_dim, bias=False):
    # PyTorch weight shape is (output_dim, input_dim); store its transpose for the kernel.
    bound = 1.0 / jnp.sqrt(jnp.float32(input_dim))
    weight = jax.random.uniform(
        k_w, (output_dim, input_dim), jnp.float32, minval=-bound, maxval=bound
    )
    weight_t = weight.T  # (input_dim, output_dim)

    feats = {
        "atom": jax.random.normal(k_x1, (n_atom, input_dim), jnp.float32),
        "bond": jax.random.normal(k_x2, (n_bond, input_dim), jnp.float32),
    }

    # f32 path: one fused pallas_call for the whole dict, no wrapper pad/slice passes.
    out = unify_size_dict(feats, weight_t)
    out = jax.tree_util.tree_map(jax.block_until_ready, out)
    for k, x in feats.items():
        ref = x @ weight.T
        assert out[k].shape == (x.shape[0], output_dim)
        assert jnp.allclose(out[k], ref, atol=1e-5, rtol=1e-5), f"f32 mismatch: {k}"

    # bf16 compute path (opt-in; only worthwhile when inputs already arrive bf16).
    # Relaxed tolerance is expected bf16 quantization, not a bug.
    out_bf16 = unify_size_dict(feats, weight_t, compute_dtype=jnp.bfloat16)
    out_bf16 = jax.tree_util.tree_map(jax.block_until_ready, out_bf16)
    for k, x in feats.items():
        ref = x @ weight.T
        assert jnp.allclose(out_bf16[k], ref, atol=5e-2, rtol=5e-2), f"bf16 mismatch: {k}"

    print("KERNEL_OK")
</pallas_src>

<mosaic_0001>
module attributes {stable_mosaic.version = 11 : i64} {
  func.func @unify_size_kernel(%arg0: i32, %arg1: memref<24x32xf32, #tpu.memory_space<vmem>>, %arg2: memref<32x64xf32, #tpu.memory_space<vmem>>, %arg3: memref<24x64xf32, #tpu.memory_space<vmem>>) attributes {dimension_semantics = [#tpu.dimension_semantics<parallel>], iteration_bounds = array<i64: 1>, scalar_prefetch = 0 : i64, scratch_operands = 0 : i64, tpu.core_type = #tpu.core_type<tc>, window_params = [{transform_indices = @transform_0, window_bounds = array<i64: 24, 32>}, {pipeline_mode = #tpu.pipeline_mode<synchronous>, transform_indices = @transform_1, window_bounds = array<i64: 32, 64>}, {transform_indices = @transform_2, window_bounds = array<i64: 24, 64>}]} {
    %c0 = arith.constant 0 : index
    %c0_0 = arith.constant 0 : index
    %0 = vector.load %arg1[%c0, %c0_0] : memref<24x32xf32, #tpu.memory_space<vmem>>, vector<24x32xf32>
    %c0_1 = arith.constant 0 : index
    %c0_2 = arith.constant 0 : index
    %1 = vector.load %arg2[%c0_1, %c0_2] : memref<32x64xf32, #tpu.memory_space<vmem>>, vector<32x64xf32>
    %cst = arith.constant dense<0.000000e+00> : vector<24x64xf32>
    %2 = tpu.matmul %0, %1, %cst {dimension_numbers = #tpu.dot_dimension_numbers<[1], [0], [0], [1], [0, 0, 1, 1], [], []>} : vector<24x32xf32>, vector<32x64xf32>, vector<24x64xf32> -> vector<24x64xf32>
    %c0_3 = arith.constant 0 : index
    %c0_4 = arith.constant 0 : index
    %3 = vector.load %arg3[%c0_3, %c0_4] : memref<24x64xf32, #tpu.memory_space<vmem>>, vector<24x64xf32>
    tpu.vector_store %arg3[%c0_3, %c0_4], %2 {strides = array<i32>} : memref<24x64xf32, #tpu.memory_space<vmem>>, vector<24x64xf32>,
    return
  }
  func.func @transform_0(%arg0: i32) -> (i32, i32) {
    %c0_i32 = arith.constant 0 : i32
    %c0_i32_0 = arith.constant 0 : i32
    return %arg0, %c0_i32 : i32, i32
  }
  func.func @transform_1(%arg0: i32) -> (i32, i32) {
    %c0_i32 = arith.constant 0 : i32
    %c0_i32_0 = arith.constant 0 : i32
    %c0_i32_1 = arith.constant 0 : i32
    return %c0_i32, %c0_i32_0 : i32, i32
  }
  func.func @transform_2(%arg0: i32) -> (i32, i32) {
    %c0_i32 = arith.constant 0 : i32
    %c0_i32_0 = arith.constant 0 : i32
    return %arg0, %c0_i32 : i32, i32
  }
}

</mosaic_0001>

<llo_original>
// kernel: tpu_custom_call.1
$region0: #{tpu_custom_call.1}
  #allocation0 [shape = 'u32[]', space=smem, size = 0x4, offset = 0x4, fixed_abs, tag = 'smem constant byte address 0x4 - core index']
  #allocation1 [shape = 'u32[144,128]{1,0:T(1,128)}', space=vmem, size = 0x12000, scoped, tag = 'internal scratch']
  %s0 = inlined_call_operand.hbm [shape: f32[24,32], index: 0, kind: input, shape index: {}]
  %s1 = inlined_call_operand.hbm [shape: f32[32,64], index: 1, kind: input, shape index: {}]
  %s2 = inlined_call_operand.hbm [shape: f32[24,64], index: 2, kind: output, shape index: {}]
  %s3 = sld [smem:[#allocation0]]
  $region26: #{tpu_custom_call.1} parent=0
    _
  %s5 = ssub.s32 1, %s3
  %s6 = scalar_select 0, %s5, %s3
  $region1: #{tpu_custom_call.1} parent=0
    #allocation2 [shape = 'u8[12288]{0}', space=vmem, size = 0x3000, scoped, tag = 'input window, operand 0, single buffered']
    #allocation3 [shape = 's32[1]{0}', space=sflag, size = 0x4, scoped, tag = 'scoped memory for tpu_custom_call.1']
    #allocation4 [shape = 's32[1]{0}', space=sflag, size = 0x4, scoped, tag = 'scoped memory for tpu_custom_call.1']
    #allocation5 [shape = 'u8[16384]{0}', space=vmem, size = 0x4000, scoped, tag = 'input window, operand 1, single buffered']
    #allocation6 [shape = 's32[1]{0}', space=sflag, size = 0x4, scoped, tag = 'scoped memory for tpu_custom_call.1']
    #allocation7 [shape = 'u8[12288]{0}', space=vmem, size = 0x3000, scoped, tag = 'output window, operand 0, single buffered']
    %7 = vsyncpa [#allocation3], 0
    %8 = vsyncpa [#allocation6], 0
    %9 = vsyncpa [#allocation4], 0
    // Predicated region
    $region2: #{tpu_custom_call.1} parent=1 // pred_check
      _
    $region3: #{tpu_custom_call.1} parent=1 // pred_check_branch
      %11 = sbr.rel (0) target = $region5
    $region4: #{tpu_custom_call.1} parent=1 // pred_region
      %s13 = ssub.s32 384, 384
      %14 = vsyncadd [#allocation3], %s13
      %s15 = sshll.u32 [#allocation2], 4
      %s16 = int_to_ptr.vmem [resolvable:$true] %s15
      %21 = dma.hbm_to_vmem [thread:$0]  %s0, 384, %s16, [#allocation3], 128, 128, 8
    $region5: #{tpu_custom_call.1} parent=1 // pred_fallthru
      _
    // Predicated region
    $region6: #{tpu_custom_call.1} parent=1 // pred_check
      _
    $region7: #{tpu_custom_call.1} parent=1 // pred_check_branch
      %23 = sbr.rel (0) target = $region9
    $region8: #{tpu_custom_call.1} parent=1 // pred_region
      %s25 = ssub.s32 512, 512
      %26 = vsyncadd [#allocation6], %s25
      %s27 = sshll.u32 [#allocation5], 4
      %s28 = int_to_ptr.vmem [resolvable:$true] %s27
      %33 = dma.hbm_to_vmem [thread:$0]  %s1, 512, %s28, [#allocation6], 128, 128, 8
    $region9: #{tpu_custom_call.1} parent=1 // pred_fallthru
      _
    // Predicated region
    $region10: #{tpu_custom_call.1} parent=1 // pred_check
      _
    $region11: #{tpu_custom_call.1} parent=1 // pred_check_branch
      %35 = sbr.rel (0) target = $region13
    $region12: #{tpu_custom_call.1} parent=1 // pred_region
      %36 = dma.done [#allocation3], 384
    $region13: #{tpu_custom_call.1} parent=1 // pred_fallthru
      _
    // Predicated region
    $region14: #{tpu_custom_call.1} parent=1 // pred_check
      _
    $region15: #{tpu_custom_call.1} parent=1 // pred_check_branch
      %38 = sbr.rel (0) target = $region17
    $region16: #{tpu_custom_call.1} parent=1 // pred_region
      %39 = dma.done [#allocation6], 512
    $region17: #{tpu_custom_call.1} parent=1 // pred_fallthru
      _
    %v40 = vld [vmem:[#allocation2] sm:$0xff]
    %v41 = vld [vmem:[#allocation2 + $0x8] sm:$0xff]
    %v42 = vld [vmem:[#allocation2 + $0x10] sm:$0xff]
    %v43 = vld [vmem:[#allocation5] sm:$0xff]
    %v44 = vld [vmem:[#allocation5 + $0x8] sm:$0xff]
    %v45 = vld [vmem:[#allocation5 + $0x10] sm:$0xff]
    %v46 = vld [vmem:[#allocation5 + $0x18] sm:$0xff]
    %vm47 = vcmask 261120
    %v49 = vsel %vm47, %v40, 0
    %v52 = vsel %vm47, %v41, 0
    %v55 = vsel %vm47, %v42, 0
    %57 = vmatprep.subr.mxu0 0.0
    %58 = vmatpush1.msra.mxu0 %v43
    %59 = vmatprep.subr.mxu0 0.0
    %60 = vmatpush1.msra.mxu0 %v44
    %61 = vmatprep.subr.mxu0 0.0
    %62 = vmatpush1.msra.mxu0 %v45
    %63 = vmatprep.subr.mxu0 0.0
    %64 = vmatpush1.msra.mxu0 %v46
    %65 = vmatprep.subr.mxu0 0.0
    %66 = vmatpush1.msra.mxu0 0.0
    %67 = vmatprep.subr.mxu0 0.0
    %68 = vmatpush1.msra.mxu0 0.0
    %69 = vmatprep.subr.mxu0 0.0
    %70 = vmatpush1.msra.mxu0 0.0
    %71 = vmatprep.subr.mxu0 0.0
    %72 = vmatpush1.msra.mxu0 0.0
    %73 = vmatprep.subr.mxu0 0.0
    %74 = vmatpush1.msra.mxu0 0.0
    %75 = vmatprep.subr.mxu0 0.0
    %76 = vmatpush1.msra.mxu0 0.0
    %77 = vmatprep.subr.mxu0 0.0
    %78 = vmatpush1.msra.mxu0 0.0
    %79 = vmatprep.subr.mxu0 0.0
    %80 = vmatpush1.msra.mxu0 0.0
    %81 = vmatprep.subr.mxu0 0.0
    %82 = vmatpush1.msra.mxu0 0.0
    %83 = vmatprep.subr.mxu0 0.0
    %84 = vmatpush1.msra.mxu0 0.0
    %85 = vmatprep.subr.mxu0 0.0
    %86 = vmatpush1.msra.mxu0 0.0
    %87 = vmatprep.subr.mxu0 0.0
    %88 = vmatpush1.msra.mxu0 0.0
    %89 = vmatprep.subr.mxu0 0.0
    %90 = vmatpush1.msra.mxu0 0.0
    %91 = vmatprep.subr.mxu0 0.0
    %92 = vmatpush1.msra.mxu0 0.0
    %93 = vmatprep.subr.mxu0 0.0
    %94 = vmatpush1.msra.mxu0 0.0
    %95 = vmatprep.subr.mxu0 0.0
    %96 = vmatpush1.msra.mxu0 0.0
    %97 = vmatprep.subr.mxu0 0.0
    %98 = vmatpush1.msra.mxu0 0.0
    %99 = vmatprep.subr.mxu0 0.0
    %100 = vmatpush1.msra.mxu0 0.0
    %101 = vmatprep.subr.mxu0 0.0
    %102 = vmatpush1.msra.mxu0 0.0
    %103 = vmatprep.subr.mxu0 0.0
    %104 = vmatpush1.msra.mxu0 0.0
    %105 = vmatprep.subr.mxu0 0.0
    %106 = vmatpush1.msra.mxu0 0.0
    %107 = vmatprep.subr.mxu0 0.0
    %108 = vmatpush1.msra.mxu0 0.0
    %109 = vmatprep.subr.mxu0 0.0
    %110 = vmatpush1.msra.mxu0 0.0
    %111 = vmatprep.subr.mxu0 0.0
    %112 = vmatpush1.msra.mxu0 0.0
    %113 = vmatprep.subr.mxu0 0.0
    %114 = vmatpush1.msra.mxu0 0.0
    %115 = vmatprep.subr.mxu0 0.0
    %116 = vmatpush1.msra.mxu0 0.0
    %117 = vmatprep.subr.mxu0 0.0
    %118 = vmatpush1.msra.mxu0 0.0
    %119 = vmatprep.subr.mxu0 0.0
    %120 = vmatpush1.msra.mxu0 0.0
    %121 = vmatprep.mubr.f32.mxu0 0.0
    %122 = vmatmul.mubr.f32.gmra.mrb[0].mxu0 %v49
    %v123 = vpop.f32.mrb[0].mxu0
    %v124 = vadd.f32 0.0, %v123
    %v125 = vpop.f32.mrb[0].mxu0
    %126 = vmatprep.mubr.f32.mxu0 0.0
    %127 = vmatmul.mubr.f32.gmra.mrb[0].mxu0 %v52
    %v128 = vpop.f32.mrb[0].mxu0
    %v129 = vadd.f32 0.0, %v128
    %v130 = vpop.f32.mrb[0].mxu0
    %131 = vmatprep.mubr.f32.mxu0 0.0
    %132 = vmatmul.mubr.f32.gmra.mrb[0].mxu0 %v55
    %v133 = vpop.f32.mrb[0].mxu0
    %v134 = vadd.f32 0.0, %v133
    %v135 = vpop.f32.mrb[0].mxu0
    %136 = vdwg.mxu0
    %vm137 = vcmask 523264
    %138 = vst.msk [vmem:[#allocation7] sm:$0xff] %vm137, %v124
    %139 = vst.msk [vmem:[#allocation7 + $0x8] sm:$0xff] %vm137, %v129
    %140 = vst.msk [vmem:[#allocation7 + $0x10] sm:$0xff] %vm137, %v134
    // Predicated region
    $region18: #{tpu_custom_call.1} parent=1 // pred_check
      _
    $region19: #{tpu_custom_call.1} parent=1 // pred_check_branch
      %142 = sbr.rel (0) target = $region21
    $region20: #{tpu_custom_call.1} parent=1 // pred_region
      %s144 = ssub.s32 384, 384
      %145 = vsyncadd [#allocation4], %s144
      %s146 = sshll.u32 [#allocation7], 4
      %s147 = int_to_ptr.vmem [resolvable:$true] %s146
      %152 = dma.vmem_to_hbm [thread:$0]  %s147, 384, %s2, [#allocation4], 128, 128, 8
    $region21: #{tpu_custom_call.1} parent=1 // pred_fallthru
      _
    // Predicated region
    $region22: #{tpu_custom_call.1} parent=1 // pred_check
      _
    $region23: #{tpu_custom_call.1} parent=1 // pred_check_branch
      %154 = sbr.rel (0) target = $region25
    $region24: #{tpu_custom_call.1} parent=1 // pred_region
      %155 = dma.done [#allocation4], 384
    $region25: #{tpu_custom_call.1} parent=1 // pred_fallthru
      _
    %156 = vsyncpa [#allocation3], 1
    %157 = vsyncpa [#allocation6], 1
    %158 = vsyncpa [#allocation4], 1

</llo_original>
